<compile_context>
chip_gen: v5e
topology: v5e:2x2
jax: 0.10.0
libtpu: 0.0.40
codegen_flags: <defaults>
</compile_context>

<pallas_src>
import jax
import jax.numpy as jnp
from jax import lax
from jax.experimental import pallas as pl
from jax.experimental.pallas import tpu as pltpu


def multi_expansion_kernel(z_ref, w1_ref, b1_ref, w2_ref, b2_ref, o_ref):
    """One L-tile: Z -> Linear -> ReLU -> Linear -> [n, tile_l, D], L2-normalized."""
    n, tl, D = o_ref.shape

    # Linear 1 + ReLU (Dropout(p=0, eval) is a no-op). bf16 x bf16 on the MXU,
    # accumulation forced to f32.
    z = z_ref[...].astype(w1_ref.dtype)
    h = jnp.dot(z, w1_ref[...], preferred_element_type=jnp.float32)
    h = jnp.maximum(h + b1_ref[...].astype(jnp.float32), 0.0)          # [tl, inner] f32

    # Linear 2 at full output width n*D (one wide MXU pass). Cast h back to the
    # weight dtype so a bf16 W2 takes the fast bf16 MXU path; acc stays f32.
    out = jnp.dot(h.astype(w2_ref.dtype), w2_ref[...],
                  preferred_element_type=jnp.float32)
    out = out + b2_ref[...].astype(jnp.float32)                        # [tl, n*D] f32

    # view(L, n, D) + permute(1, 0, 2) + F.normalize(p=2, dim=-1):
    # direction j is the lane-aligned column slice [:, j*D:(j+1)*D] (D % 128 == 0).
    # TODO(synk): for tile_l >= ~2K move the sum-of-squares onto the MXU via
    # (out*out) @ block_diag_ones[nD, n] so the epilogue stops being XLU-bound.
    for j in range(n):
        dir_j = out[:, j * D:(j + 1) * D]                              # [tl, D] view
        sq = jnp.sum(dir_j * dir_j, axis=-1, keepdims=True)
        # max(sqrt(sq), 1e-12) then divide  ==  mul by rsqrt(max(sq, 1e-24))
        inv_norm = lax.rsqrt(jnp.maximum(sq, 1e-24))
        o_ref[j, :, :] = (dir_j * inv_norm).astype(o_ref.dtype)


def multi_expansion(z, w1, b1, w2, b2, num_directions, *,
                    tile_l=None, out_dtype=jnp.float32):
    """Pallas forward of MultiExpansion.

    z:  [L, D]            (f32 or bf16)
    w1: [D, inner], b1: [1, inner]
    w2: [inner, n*D], b2: [1, n*D]   (weights stored [in, out], i.e. nn.Linear W^T)
    returns: [n, L, D] in `out_dtype`, L2-normalized along the last axis.
    """
    L, D = z.shape
    inner = w1.shape[1]
    nD = num_directions * D
    assert D % 128 == 0, "D must be a multiple of 128 (lane-aligned direction slices)"
    assert inner % 128 == 0 and nD % 128 == 0
    assert w1.shape == (D, inner) and b1.shape == (1, inner)
    assert w2.shape == (inner, nD) and b2.shape == (1, nD)

    out_dtype = jnp.dtype(out_dtype)
    sub = 16 if out_dtype.itemsize == 2 else 8          # sublane packing of stores

    # L tile: default = whole (small) sequence, capped so an f32 tile fits
    # comfortably inside v7x's 64 MiB physical VMEM and v5e's raised scoped VMEM.
    if tile_l is None:
        tile_l = min(max(L, sub), 1024)
    tile_l = int(-(-int(tile_l) // sub) * sub)          # round up to sublane multiple
    num_tiles = -(-L // tile_l)
    L_pad = num_tiles * tile_l
    if L_pad != L:
        z = jnp.pad(z, ((0, L_pad - L), (0, 0)))        # zero rows: safe, sliced off

    # Explicit scoped-VMEM budget (v5e default is only 16 MiB; v7x physical is 64).
    wbytes = (w1.size * w1.dtype.itemsize + w2.size * w2.dtype.itemsize
              + b1.size * b1.dtype.itemsize + b2.size * b2.dtype.itemsize)
    io_bytes = (2 * tile_l * D * z.dtype.itemsize
                + 2 * num_directions * tile_l * D * out_dtype.itemsize)
    tmp_bytes = 3 * tile_l * (inner + nD) * 4           # f32 intermediates, generous
    vmem_limit = int(min(max(2 * (2 * wbytes + io_bytes + tmp_bytes), 32 << 20),
                         64 << 20))

    cost = pl.CostEstimate(
        flops=2 * L_pad * (D * inner + inner * nD),
        transcendentals=num_directions * L_pad,
        bytes_accessed=(L_pad * D * z.dtype.itemsize + wbytes
                        + num_directions * L_pad * D * out_dtype.itemsize),
    )

    out = pl.pallas_call(
        multi_expansion_kernel,
        out_shape=jax.ShapeDtypeStruct((num_directions, L_pad, D), out_dtype),
        grid_spec=pltpu.PrefetchScalarGridSpec(
            num_scalar_prefetch=0,
            grid=(num_tiles,),                                     # parallel over L tiles
            in_specs=[
                pl.BlockSpec((tile_l, D), lambda i: (i, 0)),       # Z   (per-tile)
                pl.BlockSpec((D, inner), lambda i: (0, 0)),        # W1  (VMEM-resident)
                pl.BlockSpec((1, inner), lambda i: (0, 0)),        # b1  (VMEM-resident)
                pl.BlockSpec((inner, nD), lambda i: (0, 0)),       # W2  (VMEM-resident)
                pl.BlockSpec((1, nD), lambda i: (0, 0)),           # b2  (VMEM-resident)
            ],
            out_specs=pl.BlockSpec((num_directions, tile_l, D),
                                   lambda i: (0, i, 0)),
        ),
        compiler_params=pltpu.CompilerParams(
            dimension_semantics=("parallel",),                     # shard L tiles across TCs
            vmem_limit_bytes=vmem_limit,
        ),
        cost_estimate=cost,
    )(z, w1, b1, w2, b2)

    return out if L_pad == L else out[:, :L, :]


def multi_expansion_reference(z, w1, b1, w2, b2, num_directions):
    """Pure-JAX reference with the same mixed-precision contract as the kernel
    (given operand dtypes, f32 accumulation, hidden activation cast to W2 dtype)."""
    L, D = z.shape
    f32 = jnp.float32
    hp = jax.lax.Precision.HIGHEST
    h = jnp.dot(z.astype(f32), w1.astype(f32), precision=hp) + b1.astype(f32)
    h = jnp.maximum(h, 0.0).astype(w2.dtype).astype(f32)
    out = jnp.dot(h, w2.astype(f32), precision=hp) + b2.astype(f32)
    out = out.reshape(L, num_directions, D).transpose(1, 0, 2)        # [n, L, D]
    norm = jnp.maximum(jnp.linalg.norm(out, axis=-1, keepdims=True), 1e-12)
    return out / norm


if __name__ == "__main__":
    # Small, MXU/VPU-friendly shapes consistent with the module
    # (hidden_size scaled down to 128 so D stays lane-aligned while tiny).
    L = 8                  # sequence length
    hidden_size = 128      # D
    hidden_factor = 2      # inner = 256
    num_directions = 4     # n  -> second matmul width n*D = 512
    inner = hidden_size * hidden_factor

    key = jax.random.PRNGKey(0)
    kz, k1, kb1, k2, kb2, kz2 = jax.random.split(key, 6)

    z32 = jax.random.normal(kz, (L, hidden_size), dtype=jnp.float32)
    w1 = jax.random.normal(k1, (hidden_size, inner), jnp.float32) / jnp.sqrt(hidden_size)
    b1 = jax.random.normal(kb1, (1, inner), jnp.float32) * 0.01
    w2 = jax.random.normal(k2, (inner, hidden_size * num_directions), jnp.float32) / jnp.sqrt(inner)
    b2 = jax.random.normal(kb2, (1, hidden_size * num_directions), jnp.float32) * 0.01

    # Perf: kernel is weight-DMA bound at these sizes -> store/feed params and
    # activations as bf16 (MXU accumulation stays f32).
    z, w1, b1, w2, b2 = (x.astype(jnp.bfloat16) for x in (z32, w1, b1, w2, b2))

    # Case 1: tiny sequence, single grid step.
    out = jax.block_until_ready(multi_expansion(z, w1, b1, w2, b2, num_directions))
    ref = multi_expansion_reference(z, w1, b1, w2, b2, num_directions)
    assert out.shape == (num_directions, L, hidden_size)
    assert out.dtype == jnp.float32
    assert jnp.max(jnp.abs(out - ref)) < 2e-3, "mismatch vs reference"
    assert jnp.allclose(jnp.linalg.norm(out, axis=-1), 1.0, atol=1e-3), "not unit-norm"

    # Case 2: L not a multiple of the tile -> exercises the parallel L grid axis,
    # zero-padding + slicing, and VMEM-resident weights across multiple tiles.
    L2 = 300
    z2 = jax.random.normal(kz2, (L2, hidden_size), jnp.float32).astype(jnp.bfloat16)
    out2 = jax.block_until_ready(
        multi_expansion(z2, w1, b1, w2, b2, num_directions, tile_l=128))
    ref2 = multi_expansion_reference(z2, w1, b1, w2, b2, num_directions)
    assert out2.shape == (num_directions, L2, hidden_size)
    assert jnp.max(jnp.abs(out2 - ref2)) < 2e-3, "mismatch vs reference (tiled)"

    print("KERNEL_OK")
</pallas_src>

<mosaic_0001>
module attributes {stable_mosaic.version = 11 : i64} {
  func.func @multi_expansion_kernel(%arg0: i32, %arg1: memref<8x128xbf16, #tpu.memory_space<vmem>>, %arg2: memref<128x256xbf16, #tpu.memory_space<vmem>>, %arg3: memref<1x256xbf16, #tpu.memory_space<vmem>>, %arg4: memref<256x512xbf16, #tpu.memory_space<vmem>>, %arg5: memref<1x512xbf16, #tpu.memory_space<vmem>>, %arg6: memref<4x8x128xf32, #tpu.memory_space<vmem>>) attributes {dimension_semantics = [#tpu.dimension_semantics<parallel>], iteration_bounds = array<i64: 1>, scalar_prefetch = 0 : i64, scratch_operands = 0 : i64, tpu.core_type = #tpu.core_type<tc>, window_params = [{transform_indices = @transform_0, window_bounds = array<i64: 8, 128>}, {pipeline_mode = #tpu.pipeline_mode<synchronous>, transform_indices = @transform_1, window_bounds = array<i64: 128, 256>}, {pipeline_mode = #tpu.pipeline_mode<synchronous>, transform_indices = @transform_2, window_bounds = array<i64: 1, 256>}, {pipeline_mode = #tpu.pipeline_mode<synchronous>, transform_indices = @transform_3, window_bounds = array<i64: 256, 512>}, {pipeline_mode = #tpu.pipeline_mode<synchronous>, transform_indices = @transform_4, window_bounds = array<i64: 1, 512>}, {transform_indices = @transform_5, window_bounds = array<i64: 4, 8, 128>}]} {
    %c0 = arith.constant 0 : index
    %c0_0 = arith.constant 0 : index
    %0 = vector.load %arg1[%c0, %c0_0] : memref<8x128xbf16, #tpu.memory_space<vmem>>, vector<8x128xbf16>
    %c0_1 = arith.constant 0 : index
    %c0_2 = arith.constant 0 : index
    %1 = vector.load %arg2[%c0_1, %c0_2] : memref<128x256xbf16, #tpu.memory_space<vmem>>, vector<128x256xbf16>
    %cst = arith.constant dense<0.000000e+00> : vector<8x256xf32>
    %2 = tpu.matmul %0, %1, %cst {dimension_numbers = #tpu.dot_dimension_numbers<[1], [0], [0], [1], [0, 0, 1, 1], [], []>} : vector<8x128xbf16>, vector<128x256xbf16>, vector<8x256xf32> -> vector<8x256xf32>
    %c0_3 = arith.constant 0 : index
    %c0_4 = arith.constant 0 : index
    %3 = vector.load %arg3[%c0_3, %c0_4] : memref<1x256xbf16, #tpu.memory_space<vmem>>, vector<1x256xbf16>
    %4 = arith.extf %3 : vector<1x256xbf16> to vector<1x256xf32>
    %5 = vector.broadcast %4 : vector<1x256xf32> to vector<8x256xf32>
    %6 = arith.addf %2, %5 : vector<8x256xf32>
    %cst_5 = arith.constant 0.000000e+00 : f32
    %7 = vector.broadcast %cst_5 : f32 to vector<8x256xf32>
    %8 = arith.maximumf %6, %7 : vector<8x256xf32>
    %9 = arith.truncf %8 : vector<8x256xf32> to vector<8x256xbf16>
    %c0_6 = arith.constant 0 : index
    %c0_7 = arith.constant 0 : index
    %10 = vector.load %arg4[%c0_6, %c0_7] : memref<256x512xbf16, #tpu.memory_space<vmem>>, vector<256x512xbf16>
    %cst_8 = arith.constant dense<0.000000e+00> : vector<8x512xf32>
    %11 = tpu.matmul %9, %10, %cst_8 {dimension_numbers = #tpu.dot_dimension_numbers<[1], [0], [0], [1], [0, 0, 1, 1], [], []>} : vector<8x256xbf16>, vector<256x512xbf16>, vector<8x512xf32> -> vector<8x512xf32>
    %c0_9 = arith.constant 0 : index
    %c0_10 = arith.constant 0 : index
    %12 = vector.load %arg5[%c0_9, %c0_10] : memref<1x512xbf16, #tpu.memory_space<vmem>>, vector<1x512xbf16>
    %13 = arith.extf %12 : vector<1x512xbf16> to vector<1x512xf32>
    %14 = vector.broadcast %13 : vector<1x512xf32> to vector<8x512xf32>
    %15 = arith.addf %11, %14 : vector<8x512xf32>
    %16 = vector.extract_strided_slice %15 {offsets = [0, 0], sizes = [8, 128], strides = [1, 1]} : vector<8x512xf32> to vector<8x128xf32>
    %17 = arith.mulf %16, %16 : vector<8x128xf32>
    %cst_11 = arith.constant dense<0.000000e+00> : vector<8xf32>
    %18 = vector.multi_reduction <add>, %17, %cst_11 [1] : vector<8x128xf32> to vector<8xf32>
    %19 = vector.shape_cast %18 : vector<8xf32> to vector<8x1xf32>
    %cst_12 = arith.constant 1.000000e-24 : f32
    %20 = vector.broadcast %cst_12 : f32 to vector<8x1xf32>
    %21 = arith.maximumf %19, %20 : vector<8x1xf32>
    %22 = math.rsqrt %21 : vector<8x1xf32>
    %23 = vector.broadcast %22 : vector<8x1xf32> to vector<8x128xf32>
    %24 = arith.mulf %16, %23 : vector<8x128xf32>
    %c0_13 = arith.constant 0 : index
    %c0_14 = arith.constant 0 : index
    %c0_15 = arith.constant 0 : index
    %25 = vector.load %arg6[%c0_13, %c0_14, %c0_15] : memref<4x8x128xf32, #tpu.memory_space<vmem>>, vector<1x8x128xf32>
    %26 = vector.shape_cast %25 : vector<1x8x128xf32> to vector<8x128xf32>
    %27 = vector.shape_cast %24 : vector<8x128xf32> to vector<1x8x128xf32>
    tpu.vector_store %arg6[%c0_13, %c0_14, %c0_15], %27 {strides = array<i32>} : memref<4x8x128xf32, #tpu.memory_space<vmem>>, vector<1x8x128xf32>,
    %28 = vector.extract_strided_slice %15 {offsets = [0, 128], sizes = [8, 128], strides = [1, 1]} : vector<8x512xf32> to vector<8x128xf32>
    %29 = arith.mulf %28, %28 : vector<8x128xf32>
    %cst_16 = arith.constant dense<0.000000e+00> : vector<8xf32>
    %30 = vector.multi_reduction <add>, %29, %cst_16 [1] : vector<8x128xf32> to vector<8xf32>
    %31 = vector.shape_cast %30 : vector<8xf32> to vector<8x1xf32>
    %cst_17 = arith.constant 1.000000e-24 : f32
    %32 = vector.broadcast %cst_17 : f32 to vector<8x1xf32>
    %33 = arith.maximumf %31, %32 : vector<8x1xf32>
    %34 = math.rsqrt %33 : vector<8x1xf32>
    %35 = vector.broadcast %34 : vector<8x1xf32> to vector<8x128xf32>
    %36 = arith.mulf %28, %35 : vector<8x128xf32>
    %c1 = arith.constant 1 : index
    %c0_18 = arith.constant 0 : index
    %c0_19 = arith.constant 0 : index
    %37 = vector.load %arg6[%c1, %c0_18, %c0_19] : memref<4x8x128xf32, #tpu.memory_space<vmem>>, vector<1x8x128xf32>
    %38 = vector.shape_cast %37 : vector<1x8x128xf32> to vector<8x128xf32>
    %39 = vector.shape_cast %36 : vector<8x128xf32> to vector<1x8x128xf32>
    tpu.vector_store %arg6[%c1, %c0_18, %c0_19], %39 {strides = array<i32>} : memref<4x8x128xf32, #tpu.memory_space<vmem>>, vector<1x8x128xf32>,
    %40 = vector.extract_strided_slice %15 {offsets = [0, 256], sizes = [8, 128], strides = [1, 1]} : vector<8x512xf32> to vector<8x128xf32>
    %41 = arith.mulf %40, %40 : vector<8x128xf32>
    %cst_20 = arith.constant dense<0.000000e+00> : vector<8xf32>
    %42 = vector.multi_reduction <add>, %41, %cst_20 [1] : vector<8x128xf32> to vector<8xf32>
    %43 = vector.shape_cast %42 : vector<8xf32> to vector<8x1xf32>
    %cst_21 = arith.constant 1.000000e-24 : f32
    %44 = vector.broadcast %cst_21 : f32 to vector<8x1xf32>
    %45 = arith.maximumf %43, %44 : vector<8x1xf32>
    %46 = math.rsqrt %45 : vector<8x1xf32>
    %47 = vector.broadcast %46 : vector<8x1xf32> to vector<8x128xf32>
    %48 = arith.mulf %40, %47 : vector<8x128xf32>
    %c2 = arith.constant 2 : index
    %c0_22 = arith.constant 0 : index
    %c0_23 = arith.constant 0 : index
    %49 = vector.load %arg6[%c2, %c0_22, %c0_23] : memref<4x8x128xf32, #tpu.memory_space<vmem>>, vector<1x8x128xf32>
    %50 = vector.shape_cast %49 : vector<1x8x128xf32> to vector<8x128xf32>
    %51 = vector.shape_cast %48 : vector<8x128xf32> to vector<1x8x128xf32>
    tpu.vector_store %arg6[%c2, %c0_22, %c0_23], %51 {strides = array<i32>} : memref<4x8x128xf32, #tpu.memory_space<vmem>>, vector<1x8x128xf32>,
    %52 = vector.extract_strided_slice %15 {offsets = [0, 384], sizes = [8, 128], strides = [1, 1]} : vector<8x512xf32> to vector<8x128xf32>
    %53 = arith.mulf %52, %52 : vector<8x128xf32>
    %cst_24 = arith.constant dense<0.000000e+00> : vector<8xf32>
    %54 = vector.multi_reduction <add>, %53, %cst_24 [1] : vector<8x128xf32> to vector<8xf32>
    %55 = vector.shape_cast %54 : vector<8xf32> to vector<8x1xf32>
    %cst_25 = arith.constant 1.000000e-24 : f32
    %56 = vector.broadcast %cst_25 : f32 to vector<8x1xf32>
    %57 = arith.maximumf %55, %56 : vector<8x1xf32>
    %58 = math.rsqrt %57 : vector<8x1xf32>
    %59 = vector.broadcast %58 : vector<8x1xf32> to vector<8x128xf32>
    %60 = arith.mulf %52, %59 : vector<8x128xf32>
    %c3 = arith.constant 3 : index
    %c0_26 = arith.constant 0 : index
    %c0_27 = arith.constant 0 : index
    %61 = vector.load %arg6[%c3, %c0_26, %c0_27] : memref<4x8x128xf32, #tpu.memory_space<vmem>>, vector<1x8x128xf32>
    %62 = vector.shape_cast %61 : vector<1x8x128xf32> to vector<8x128xf32>
    %63 = vector.shape_cast %60 : vector<8x128xf32> to vector<1x8x128xf32>
    tpu.vector_store %arg6[%c3, %c0_26, %c0_27], %63 {strides = array<i32>} : memref<4x8x128xf32, #tpu.memory_space<vmem>>, vector<1x8x128xf32>,
    return
  }
  func.func @transform_0(%arg0: i32) -> (i32, i32) {
    %c0_i32 = arith.constant 0 : i32
    %c0_i32_0 = arith.constant 0 : i32
    return %arg0, %c0_i32 : i32, i32
  }
  func.func @transform_1(%arg0: i32) -> (i32, i32) {
    %c0_i32 = arith.constant 0 : i32
    %c0_i32_0 = arith.constant 0 : i32
    %c0_i32_1 = arith.constant 0 : i32
    return %c0_i32, %c0_i32_0 : i32, i32
  }
  func.func @transform_2(%arg0: i32) -> (i32, i32) {
    %c0_i32 = arith.constant 0 : i32
    %c0_i32_0 = arith.constant 0 : i32
    %c0_i32_1 = arith.constant 0 : i32
    return %c0_i32, %c0_i32_0 : i32, i32
  }
  func.func @transform_3(%arg0: i32) -> (i32, i32) {
    %c0_i32 = arith.constant 0 : i32
    %c0_i32_0 = arith.constant 0 : i32
    %c0_i32_1 = arith.constant 0 : i32
    return %c0_i32, %c0_i32_0 : i32, i32
  }
  func.func @transform_4(%arg0: i32) -> (i32, i32) {
    %c0_i32 = arith.constant 0 : i32
    %c0_i32_0 = arith.constant 0 : i32
    %c0_i32_1 = arith.constant 0 : i32
    return %c0_i32, %c0_i32_0 : i32, i32
  }
  func.func @transform_5(%arg0: i32) -> (i32, i32, i32) {
    %c0_i32 = arith.constant 0 : i32
    %c0_i32_0 = arith.constant 0 : i32
    %c0_i32_1 = arith.constant 0 : i32
    return %c0_i32, %arg0, %c0_i32_0 : i32, i32, i32
  }
}

</mosaic_0001>

<llo_original>
// kernel: tpu_custom_call.1
$region0: #{tpu_custom_call.1}
  #allocation0 [shape = 'u32[]', space=smem, size = 0x4, offset = 0x4, fixed_abs, tag = 'smem constant byte address 0x4 - core index']
  #allocation1 [shape = 'u32[72,128]{1,0:T(1,128)}', space=vmem, size = 0x9000, scoped, tag = 'internal scratch']
  %s0 = inlined_call_operand.hbm [shape: bf16[8,128], index: 0, kind: input, shape index: {}]
  %s1 = inlined_call_operand.hbm [shape: bf16[128,256], index: 1, kind: input, shape index: {}]
  %s2 = inlined_call_operand.hbm [shape: bf16[1,256], index: 2, kind: input, shape index: {}]
  %s3 = inlined_call_operand.hbm [shape: bf16[256,512], index: 3, kind: input, shape index: {}]
  %s4 = inlined_call_operand.hbm [shape: bf16[1,512], index: 4, kind: input, shape index: {}]
  %s5 = inlined_call_operand.hbm [shape: f32[4,8,128], index: 5, kind: output, shape index: {}]
  %s6 = sld [smem:[#allocation0]]
  $region50: #{tpu_custom_call.1} parent=0
    _
  %s8 = ssub.s32 1, %s6
  %s9 = scalar_select 0, %s8, %s6
  $region1: #{tpu_custom_call.1} parent=0
    #allocation2 [shape = 'u8[2048]{0}', space=vmem, size = 0x800, scoped, tag = 'input window, operand 0, single buffered']
    #allocation3 [shape = 's32[1]{0}', space=sflag, size = 0x4, scoped, tag = 'scoped memory for tpu_custom_call.1']
    #allocation4 [shape = 's32[1]{0}', space=sflag, size = 0x4, scoped, tag = 'scoped memory for tpu_custom_call.1']
    #allocation5 [shape = 'u8[65536]{0}', space=vmem, size = 0x10000, scoped, tag = 'input window, operand 1, single buffered']
    #allocation6 [shape = 's32[1]{0}', space=sflag, size = 0x4, scoped, tag = 'scoped memory for tpu_custom_call.1']
    #allocation7 [shape = 'u8[1024]{0}', space=vmem, size = 0x400, scoped, tag = 'input window, operand 2, single buffered']
    #allocation8 [shape = 'u8[262144]{0}', space=vmem, size = 0x40000, scoped, tag = 'input window, operand 3, single buffered']
    #allocation9 [shape = 's32[1]{0}', space=sflag, size = 0x4, scoped, tag = 'scoped memory for tpu_custom_call.1']
    #allocation10 [shape = 'u8[2048]{0}', space=vmem, size = 0x800, scoped, tag = 'input window, operand 4, single buffered']
    #allocation11 [shape = 'u8[16384]{0}', space=vmem, size = 0x4000, scoped, tag = 'output window, operand 0, single buffered']
    %10 = vsyncpa [#allocation3], 0
    %11 = vsyncpa [#allocation6], 0
    %12 = vsyncpa [#allocation9], 0
    %13 = vsyncpa [#allocation4], 0
    // Predicated region
    $region2: #{tpu_custom_call.1} parent=1 // pred_check
      _
    $region3: #{tpu_custom_call.1} parent=1 // pred_check_branch
      %15 = sbr.rel (0) target = $region5
    $region4: #{tpu_custom_call.1} parent=1 // pred_region
      %17 = vsyncadd [#allocation3], 0
      %s19 = sshll.u32 %s0, 4
      %s20 = int_to_ptr.hbm [resolvable:$true] %s19
      %s21 = sshll.u32 [#allocation2], 4
      %s22 = int_to_ptr.vmem [resolvable:$true] %s21
      %24 = dma.hbm_to_vmem [thread:$0]  %s20, 64, %s22, [#allocation3]
    $region5: #{tpu_custom_call.1} parent=1 // pred_fallthru
      _
    // Predicated region
    $region6: #{tpu_custom_call.1} parent=1 // pred_check
      _
    $region7: #{tpu_custom_call.1} parent=1 // pred_check_branch
      %26 = sbr.rel (0) target = $region9
    $region8: #{tpu_custom_call.1} parent=1 // pred_region
      %28 = vsyncadd [#allocation6], 0
      %s29 = sshll.u32 %s1, 4
      %s30 = int_to_ptr.hbm [resolvable:$true] %s29
      %s31 = sshll.u32 [#allocation5], 4
      %s32 = int_to_ptr.vmem [resolvable:$true] %s31
      %37 = dma.hbm_to_vmem [thread:$0]  %s30, 2048, %s32, [#allocation6], 128, 128, 8
    $region9: #{tpu_custom_call.1} parent=1 // pred_fallthru
      _
    // Predicated region
    $region10: #{tpu_custom_call.1} parent=1 // pred_check
      _
    $region11: #{tpu_custom_call.1} parent=1 // pred_check_branch
      %39 = sbr.rel (0) target = $region13
    $region12: #{tpu_custom_call.1} parent=1 // pred_region
      %41 = vsyncadd [#allocation6], 0
      %s43 = sshll.u32 %s2, 4
      %s44 = int_to_ptr.hbm [resolvable:$true] %s43
      %s45 = sshll.u32 [#allocation7], 4
      %s46 = int_to_ptr.vmem [resolvable:$true] %s45
      %48 = dma.hbm_to_vmem [thread:$0]  %s44, 32, %s46, [#allocation6]
    $region13: #{tpu_custom_call.1} parent=1 // pred_fallthru
      _
    // Predicated region
    $region14: #{tpu_custom_call.1} parent=1 // pred_check
      _
    $region15: #{tpu_custom_call.1} parent=1 // pred_check_branch
      %50 = sbr.rel (0) target = $region17
    $region16: #{tpu_custom_call.1} parent=1 // pred_region
      %52 = vsyncadd [#allocation9], 0
      %s53 = sshll.u32 %s3, 4
      %s54 = int_to_ptr.hbm [resolvable:$true] %s53
      %s55 = sshll.u32 [#allocation8], 4
      %s56 = int_to_ptr.vmem [resolvable:$true] %s55
      %61 = dma.hbm_to_vmem [thread:$0]  %s54, 8192, %s56, [#allocation9], 256, 256, 16
    $region17: #{tpu_custom_call.1} parent=1 // pred_fallthru
      _
    // Predicated region
    $region18: #{tpu_custom_call.1} parent=1 // pred_check
      _
    $region19: #{tpu_custom_call.1} parent=1 // pred_check_branch
      %63 = sbr.rel (0) target = $region21
    $region20: #{tpu_custom_call.1} parent=1 // pred_region
      %65 = vsyncadd [#allocation9], 0
      %s67 = sshll.u32 %s4, 4
      %s68 = int_to_ptr.hbm [resolvable:$true] %s67
      %s69 = sshll.u32 [#allocation10], 4
      %s70 = int_to_ptr.vmem [resolvable:$true] %s69
      %72 = dma.hbm_to_vmem [thread:$0]  %s68, 64, %s70, [#allocation9]
    $region21: #{tpu_custom_call.1} parent=1 // pred_fallthru
      _
    // Predicated region
    $region22: #{tpu_custom_call.1} parent=1 // pred_check
      _
    $region23: #{tpu_custom_call.1} parent=1 // pred_check_branch
      %74 = sbr.rel (0) target = $region25
    $region24: #{tpu_custom_call.1} parent=1 // pred_region
      %76 = dma.done [#allocation3], 64
    $region25: #{tpu_custom_call.1} parent=1 // pred_fallthru
      _
    // Predicated region
    $region26: #{tpu_custom_call.1} parent=1 // pred_check
      _
    $region27: #{tpu_custom_call.1} parent=1 // pred_check_branch
      %78 = sbr.rel (0) target = $region29
    $region28: #{tpu_custom_call.1} parent=1 // pred_region
      %80 = dma.done [#allocation6], 2048
    $region29: #{tpu_custom_call.1} parent=1 // pred_fallthru
      _
    // Predicated region
    $region30: #{tpu_custom_call.1} parent=1 // pred_check
      _
    $region31: #{tpu_custom_call.1} parent=1 // pred_check_branch
      %82 = sbr.rel (0) target = $region33
    $region32: #{tpu_custom_call.1} parent=1 // pred_region
      %84 = dma.done [#allocation6], 32
    $region33: #{tpu_custom_call.1} parent=1 // pred_fallthru
      _
    // Predicated region
    $region34: #{tpu_custom_call.1} parent=1 // pred_check
      _
    $region35: #{tpu_custom_call.1} parent=1 // pred_check_branch
      %86 = sbr.rel (0) target = $region37
    $region36: #{tpu_custom_call.1} parent=1 // pred_region
      %88 = dma.done [#allocation9], 8192
    $region37: #{tpu_custom_call.1} parent=1 // pred_fallthru
      _
    // Predicated region
    $region38: #{tpu_custom_call.1} parent=1 // pred_check
      _
    $region39: #{tpu_custom_call.1} parent=1 // pred_check_branch
      %90 = sbr.rel (0) target = $region41
    $region40: #{tpu_custom_call.1} parent=1 // pred_region
      %92 = dma.done [#allocation9], 64
    $region41: #{tpu_custom_call.1} parent=1 // pred_fallthru
      _
    %v93 = vld [vmem:[#allocation2] sm:$0xf]
    %v94 = vld [vmem:[#allocation5] sm:$0xff]
    %v95 = vld [vmem:[#allocation5 + $0x8] sm:$0xff]
    %v96 = vld [vmem:[#allocation5 + $0x10] sm:$0xff]
    %v97 = vld [vmem:[#allocation5 + $0x18] sm:$0xff]
    %v98 = vld [vmem:[#allocation5 + $0x20] sm:$0xff]
    %v99 = vld [vmem:[#allocation5 + $0x28] sm:$0xff]
    %v100 = vld [vmem:[#allocation5 + $0x30] sm:$0xff]
    %v101 = vld [vmem:[#allocation5 + $0x38] sm:$0xff]
    %v102 = vld [vmem:[#allocation5 + $0x40] sm:$0xff]
    %v103 = vld [vmem:[#allocation5 + $0x48] sm:$0xff]
    %v104 = vld [vmem:[#allocation5 + $0x50] sm:$0xff]
    %v105 = vld [vmem:[#allocation5 + $0x58] sm:$0xff]
    %v106 = vld [vmem:[#allocation5 + $0x60] sm:$0xff]
    %v107 = vld [vmem:[#allocation5 + $0x68] sm:$0xff]
    %v108 = vld [vmem:[#allocation5 + $0x70] sm:$0xff]
    %v109 = vld [vmem:[#allocation5 + $0x78] sm:$0xff]
    %v110 = vld [vmem:[#allocation7] sm:$0x3]
    %v111 = vunpack.c.l.bf16 %v110
    %v113 = vperm.slane %v111, 0
    %v114 = vperm.slane %v111, 2
    %v117 = vperm.slane %v113, 0
    %v118 = vperm.slane %v114, 0
    %v135 = vunpack.c.l.b16 %v94
    %v136 = vunpack.c.h.b16 %v94
    %v137 = vunpack.c.l.b16 %v95
    %v138 = vunpack.c.h.b16 %v95
    %v139 = vunpack.c.l.b16 %v96
    %v140 = vunpack.c.h.b16 %v96
    %v141 = vunpack.c.l.b16 %v97
    %v142 = vunpack.c.h.b16 %v97
    %v143 = vunpack.c.l.b16 %v98
    %v144 = vunpack.c.h.b16 %v98
    %v145 = vunpack.c.l.b16 %v99
    %v146 = vunpack.c.h.b16 %v99
    %v147 = vunpack.c.l.b16 %v100
    %v148 = vunpack.c.h.b16 %v100
    %v149 = vunpack.c.l.b16 %v101
    %v150 = vunpack.c.h.b16 %v101
    %v151 = vunpack.c.l.b16 %v102
    %v152 = vunpack.c.h.b16 %v102
    %v153 = vunpack.c.l.b16 %v103
    %v154 = vunpack.c.h.b16 %v103
    %v155 = vunpack.c.l.b16 %v104
    %v156 = vunpack.c.h.b16 %v104
    %v157 = vunpack.c.l.b16 %v105
    %v158 = vunpack.c.h.b16 %v105
    %v159 = vunpack.c.l.b16 %v106
    %v160 = vunpack.c.h.b16 %v106
    %v161 = vunpack.c.l.b16 %v107
    %v162 = vunpack.c.h.b16 %v107
    %v163 = vunpack.c.l.b16 %v108
    %v164 = vunpack.c.h.b16 %v108
    %v165 = vunpack.c.l.b16 %v109
    %v166 = vunpack.c.h.b16 %v109
    %v167 = vpack.c.b16 %v137, %v135
    %v168 = vpack.c.b16 %v138, %v136
    %v169 = vpack.c.b16 %v141, %v139
    %v170 = vpack.c.b16 %v142, %v140
    %v171 = vpack.c.b16 %v145, %v143
    %v172 = vpack.c.b16 %v146, %v144
    %v173 = vpack.c.b16 %v149, %v147
    %v174 = vpack.c.b16 %v150, %v148
    %v175 = vpack.c.b16 %v153, %v151
    %v176 = vpack.c.b16 %v154, %v152
    %v177 = vpack.c.b16 %v157, %v155
    %v178 = vpack.c.b16 %v158, %v156
    %v179 = vpack.c.b16 %v161, %v159
    %v180 = vpack.c.b16 %v162, %v160
    %v181 = vpack.c.b16 %v165, %v163
    %v182 = vpack.c.b16 %v166, %v164
    %199 = vmatpush.bf16.msra.mxu0 %v181
    %200 = vmatpush.bf16.msra.mxu0 %v179
    %201 = vmatpush.bf16.msra.mxu0 %v177
    %202 = vmatpush.bf16.msra.mxu0 %v175
    %203 = vmatpush.bf16.msra.mxu0 %v173
    %204 = vmatpush.bf16.msra.mxu0 %v171
    %205 = vmatpush.bf16.msra.mxu0 %v169
    %206 = vmatpush.bf16.msra.mxu0 %v167
    %207 = vmatmul.bf16.gmra.mxu0 %v93
    %v208 = vpop.f32.mrf.mxu0
    %v209 = vadd.f32 %v117, %v208
    %v210 = vpop.f32.mrf.mxu0
    %211 = vdwg.mxu0
    %212 = vmatpush.bf16.msra.mxu0 %v182
    %213 = vmatpush.bf16.msra.mxu0 %v180
    %214 = vmatpush.bf16.msra.mxu0 %v178
    %215 = vmatpush.bf16.msra.mxu0 %v176
    %216 = vmatpush.bf16.msra.mxu0 %v174
    %217 = vmatpush.bf16.msra.mxu0 %v172
    %218 = vmatpush.bf16.msra.mxu0 %v170
    %219 = vmatpush.bf16.msra.mxu0 %v168
    %220 = vmatmul.bf16.gmra.mxu0 %v93
    %v221 = vpop.f32.mrf.mxu0
    %v222 = vadd.f32 %v118, %v221
    %v223 = vpop.f32.mrf.mxu0
    %224 = vdwg.mxu0
    %v225 = vmax.f32 %v209, 0.0
    %v226 = vmax.f32 %v222, 0.0
    %v227 = vpack.c.bf16 %v225, %v225
    %v228 = vpack.c.bf16 %v226, %v226
    %v229 = vld [vmem:[#allocation8] sm:$0xff]
    %v230 = vld [vmem:[#allocation8 + $0x8] sm:$0xff]
    %v231 = vld [vmem:[#allocation8 + $0x10] sm:$0xff]
    %v232 = vld [vmem:[#allocation8 + $0x18] sm:$0xff]
    %v233 = vld [vmem:[#allocation8 + $0x20] sm:$0xff]
    %v234 = vld [vmem:[#allocation8 + $0x28] sm:$0xff]
    %v235 = vld [vmem:[#allocation8 + $0x30] sm:$0xff]
    %v236 = vld [vmem:[#allocation8 + $0x38] sm:$0xff]
    %v237 = vld [vmem:[#allocation8 + $0x40] sm:$0xff]
    %v238 = vld [vmem:[#allocation8 + $0x48] sm:$0xff]
    %v239 = vld [vmem:[#allocation8 + $0x50] sm:$0xff]
    %v240 = vld [vmem:[#allocation8 + $0x58] sm:$0xff]
    %v241 = vld [vmem:[#allocation8 + $0x60] sm:$0xff]
    %v242 = vld [vmem:[#allocation8 + $0x68] sm:$0xff]
    %v243 = vld [vmem:[#allocation8 + $0x70] sm:$0xff]
    %v244 = vld [vmem:[#allocation8 + $0x78] sm:$0xff]
    %v245 = vld [vmem:[#allocation8 + $0x80] sm:$0xff]
    %v246 = vld [vmem:[#allocation8 + $0x88] sm:$0xff]
    %v247 = vld [vmem:[#allocation8 + $0x90] sm:$0xff]
    %v248 = vld [vmem:[#allocation8 + $0x98] sm:$0xff]
    %v249 = vld [vmem:[#allocation8 + $0xa0] sm:$0xff]
    %v250 = vld [vmem:[#allocation8 + $0xa8] sm:$0xff]
    %v251 = vld [vmem:[#allocation8 + $0xb0] sm:$0xff]
    %v252 = vld [vmem:[#allocation8 + $0xb8] sm:$0xff]
    %v253 = vld [vmem:[#allocation8 + $0xc0] sm:$0xff]
    %v254 = vld [vmem:[#allocation8 + $0xc8] sm:$0xff]
    %v255 = vld [vmem:[#allocation8 + $0xd0] sm:$0xff]
    %v256 = vld [vmem:[#allocation8 + $0xd8] sm:$0xff]
    %v257 = vld [vmem:[#allocation8 + $0xe0] sm:$0xff]
    %v258 = vld [vmem:[#allocation8 + $0xe8] sm:$0xff]
    %v259 = vld [vmem:[#allocation8 + $0xf0] sm:$0xff]
    %v260 = vld [vmem:[#allocation8 + $0xf8] sm:$0xff]
    %v261 = vld [vmem:[#allocation8 + $0x100] sm:$0xff]
    %v262 = vld [vmem:[#allocation8 + $0x108] sm:$0xff]
    %v263 = vld [vmem:[#allocation8 + $0x110] sm:$0xff]
    %v264 = vld [vmem:[#allocation8 + $0x118] sm:$0xff]
    %v265 = vld [vmem:[#allocation8 + $0x120] sm:$0xff]
    %v266 = vld [vmem:[#allocation8 + $0x128] sm:$0xff]
    %v267 = vld [vmem:[#allocation8 + $0x130] sm:$0xff]
    %v268 = vld [vmem:[#allocation8 + $0x138] sm:$0xff]
    %v269 = vld [vmem:[#allocation8 + $0x140] sm:$0xff]
    %v270 = vld [vmem:[#allocation8 + $0x148] sm:$0xff]
    %v271 = vld [vmem:[#allocation8 + $0x150] sm:$0xff]
    %v272 = vld [vmem:[#allocation8 + $0x158] sm:$0xff]
    %v273 = vld [vmem:[#allocation8 + $0x160] sm:$0xff]
    %v274 = vld [vmem:[#allocation8 + $0x168] sm:$0xff]
    %v275 = vld [vmem:[#allocation8 + $0x170] sm:$0xff]
    %v276 = vld [vmem:[#allocation8 + $0x178] sm:$0xff]
    %v277 = vld [vmem:[#allocation8 + $0x180] sm:$0xff]
    %v278 = vld [vmem:[#allocation8 + $0x188] sm:$0xff]
    %v279 = vld [vmem:[#allocation8 + $0x190] sm:$0xff]
    %v280 = vld [vmem:[#allocation8 + $0x198] sm:$0xff]
    %v281 = vld [vmem:[#allocation8 + $0x1a0] sm:$0xff]
    %v282 = vld [vmem:[#allocation8 + $0x1a8] sm:$0xff]
    %v283 = vld [vmem:[#allocation8 + $0x1b0] sm:$0xff]
    %v284 = vld [vmem:[#allocation8 + $0x1b8] sm:$0xff]
    %v285 = vld [vmem:[#allocation8 + $0x1c0] sm:$0xff]
    %v286 = vld [vmem:[#allocation8 + $0x1c8] sm:$0xff]
    %v287 = vld [vmem:[#allocation8 + $0x1d0] sm:$0xff]
    %v288 = vld [vmem:[#allocation8 + $0x1d8] sm:$0xff]
    %v289 = vld [vmem:[#allocation8 + $0x1e0] sm:$0xff]
    %v290 = vld [vmem:[#allocation8 + $0x1e8] sm:$0xff]
    %v291 = vld [vmem:[#allocation8 + $0x1f0] sm:$0xff]
    %v292 = vld [vmem:[#allocation8 + $0x1f8] sm:$0xff]
    %v293 = vld [vmem:[#allocation10] sm:$0xf]
    %v294 = vunpack.c.l.bf16 %v293
    %v296 = vperm.slane %v294, 0
    %v297 = vperm.slane %v294, 2
    %v298 = vperm.slane %v294, 4
    %v299 = vperm.slane %v294, 6
    %v304 = vperm.slane %v296, 0
    %v305 = vperm.slane %v297, 0
    %v306 = vperm.slane %v298, 0
    %v307 = vperm.slane %v299, 0
    %v372 = vunpack.c.l.b16 %v229
    %v373 = vunpack.c.h.b16 %v229
    %v374 = vunpack.c.l.b16 %v230
    %v375 = vunpack.c.h.b16 %v230
    %v376 = vunpack.c.l.b16 %v231
    %v377 = vunpack.c.h.b16 %v231
    %v378 = vunpack.c.l.b16 %v232
    %v379 = vunpack.c.h.b16 %v232
    %v380 = vunpack.c.l.b16 %v233
    %v381 = vunpack.c.h.b16 %v233
    %v382 = vunpack.c.l.b16 %v234
    %v383 = vunpack.c.h.b16 %v234
    %v384 = vunpack.c.l.b16 %v235
    %v385 = vunpack.c.h.b16 %v235
    %v386 = vunpack.c.l.b16 %v236
    %v387 = vunpack.c.h.b16 %v236
    %v388 = vunpack.c.l.b16 %v237
    %v389 = vunpack.c.h.b16 %v237
    %v390 = vunpack.c.l.b16 %v238
    %v391 = vunpack.c.h.b16 %v238
    %v392 = vunpack.c.l.b16 %v239
    %v393 = vunpack.c.h.b16 %v239
    %v394 = vunpack.c.l.b16 %v240
    %v395 = vunpack.c.h.b16 %v240
    %v396 = vunpack.c.l.b16 %v241
    %v397 = vunpack.c.h.b16 %v241
    %v398 = vunpack.c.l.b16 %v242
    %v399 = vunpack.c.h.b16 %v242
    %v400 = vunpack.c.l.b16 %v243
    %v401 = vunpack.c.h.b16 %v243
    %v402 = vunpack.c.l.b16 %v244
    %v403 = vunpack.c.h.b16 %v244
    %v404 = vunpack.c.l.b16 %v245
    %v405 = vunpack.c.h.b16 %v245
    %v406 = vunpack.c.l.b16 %v246
    %v407 = vunpack.c.h.b16 %v246
    %v408 = vunpack.c.l.b16 %v247
    %v409 = vunpack.c.h.b16 %v247
    %v410 = vunpack.c.l.b16 %v248
    %v411 = vunpack.c.h.b16 %v248
    %v412 = vunpack.c.l.b16 %v249
    %v413 = vunpack.c.h.b16 %v249
    %v414 = vunpack.c.l.b16 %v250
    %v415 = vunpack.c.h.b16 %v250
    %v416 = vunpack.c.l.b16 %v251
    %v417 = vunpack.c.h.b16 %v251
    %v418 = vunpack.c.l.b16 %v252
    %v419 = vunpack.c.h.b16 %v252
    %v420 = vunpack.c.l.b16 %v253
    %v421 = vunpack.c.h.b16 %v253
    %v422 = vunpack.c.l.b16 %v254
    %v423 = vunpack.c.h.b16 %v254
    %v424 = vunpack.c.l.b16 %v255
    %v425 = vunpack.c.h.b16 %v255
    %v426 = vunpack.c.l.b16 %v256
    %v427 = vunpack.c.h.b16 %v256
    %v428 = vunpack.c.l.b16 %v257
    %v429 = vunpack.c.h.b16 %v257
    %v430 = vunpack.c.l.b16 %v258
    %v431 = vunpack.c.h.b16 %v258
    %v432 = vunpack.c.l.b16 %v259
    %v433 = vunpack.c.h.b16 %v259
    %v434 = vunpack.c.l.b16 %v260
    %v435 = vunpack.c.h.b16 %v260
    %v436 = vunpack.c.l.b16 %v261
    %v437 = vunpack.c.h.b16 %v261
    %v438 = vunpack.c.l.b16 %v262
    %v439 = vunpack.c.h.b16 %v262
    %v440 = vunpack.c.l.b16 %v263
    %v441 = vunpack.c.h.b16 %v263
    %v442 = vunpack.c.l.b16 %v264
    %v443 = vunpack.c.h.b16 %v264
    %v444 = vunpack.c.l.b16 %v265
    %v445 = vunpack.c.h.b16 %v265
    %v446 = vunpack.c.l.b16 %v266
    %v447 = vunpack.c.h.b16 %v266
    %v448 = vunpack.c.l.b16 %v267
    %v449 = vunpack.c.h.b16 %v267
    %v450 = vunpack.c.l.b16 %v268
    %v451 = vunpack.c.h.b16 %v268
    %v452 = vunpack.c.l.b16 %v269
    %v453 = vunpack.c.h.b16 %v269
    %v454 = vunpack.c.l.b16 %v270
    %v455 = vunpack.c.h.b16 %v270
    %v456 = vunpack.c.l.b16 %v271
    %v457 = vunpack.c.h.b16 %v271
    %v458 = vunpack.c.l.b16 %v272
    %v459 = vunpack.c.h.b16 %v272
    %v460 = vunpack.c.l.b16 %v273
    %v461 = vunpack.c.h.b16 %v273
    %v462 = vunpack.c.l.b16 %v274
    %v463 = vunpack.c.h.b16 %v274
    %v464 = vunpack.c.l.b16 %v275
    %v465 = vunpack.c.h.b16 %v275
    %v466 = vunpack.c.l.b16 %v276
    %v467 = vunpack.c.h.b16 %v276
    %v468 = vunpack.c.l.b16 %v277
    %v469 = vunpack.c.h.b16 %v277
    %v470 = vunpack.c.l.b16 %v278
    %v471 = vunpack.c.h.b16 %v278
    %v472 = vunpack.c.l.b16 %v279
    %v473 = vunpack.c.h.b16 %v279
    %v474 = vunpack.c.l.b16 %v280
    %v475 = vunpack.c.h.b16 %v280
    %v476 = vunpack.c.l.b16 %v281
    %v477 = vunpack.c.h.b16 %v281
    %v478 = vunpack.c.l.b16 %v282
    %v479 = vunpack.c.h.b16 %v282
    %v480 = vunpack.c.l.b16 %v283
    %v481 = vunpack.c.h.b16 %v283
    %v482 = vunpack.c.l.b16 %v284
    %v483 = vunpack.c.h.b16 %v284
    %v484 = vunpack.c.l.b16 %v285
    %v485 = vunpack.c.h.b16 %v285
    %v486 = vunpack.c.l.b16 %v286
    %v487 = vunpack.c.h.b16 %v286
    %v488 = vunpack.c.l.b16 %v287
    %v489 = vunpack.c.h.b16 %v287
    %v490 = vunpack.c.l.b16 %v288
    %v491 = vunpack.c.h.b16 %v288
    %v492 = vunpack.c.l.b16 %v289
    %v493 = vunpack.c.h.b16 %v289
    %v494 = vunpack.c.l.b16 %v290
    %v495 = vunpack.c.h.b16 %v290
    %v496 = vunpack.c.l.b16 %v291
    %v497 = vunpack.c.h.b16 %v291
    %v498 = vunpack.c.l.b16 %v292
    %v499 = vunpack.c.h.b16 %v292
    %v500 = vpack.c.b16 %v376, %v372
    %v501 = vpack.c.b16 %v377, %v373
    %v502 = vpack.c.b16 %v378, %v374
    %v503 = vpack.c.b16 %v379, %v375
    %v504 = vpack.c.b16 %v384, %v380
    %v505 = vpack.c.b16 %v385, %v381
    %v506 = vpack.c.b16 %v386, %v382
    %v507 = vpack.c.b16 %v387, %v383
    %v508 = vpack.c.b16 %v392, %v388
    %v509 = vpack.c.b16 %v393, %v389
    %v510 = vpack.c.b16 %v394, %v390
    %v511 = vpack.c.b16 %v395, %v391
    %v512 = vpack.c.b16 %v400, %v396
    %v513 = vpack.c.b16 %v401, %v397
    %v514 = vpack.c.b16 %v402, %v398
    %v515 = vpack.c.b16 %v403, %v399
    %v516 = vpack.c.b16 %v408, %v404
    %v517 = vpack.c.b16 %v409, %v405
    %v518 = vpack.c.b16 %v410, %v406
    %v519 = vpack.c.b16 %v411, %v407
    %v520 = vpack.c.b16 %v416, %v412
    %v521 = vpack.c.b16 %v417, %v413
    %v522 = vpack.c.b16 %v418, %v414
    %v523 = vpack.c.b16 %v419, %v415
    %v524 = vpack.c.b16 %v424, %v420
    %v525 = vpack.c.b16 %v425, %v421
    %v526 = vpack.c.b16 %v426, %v422
    %v527 = vpack.c.b16 %v427, %v423
    %v528 = vpack.c.b16 %v432, %v428
    %v529 = vpack.c.b16 %v433, %v429
    %v530 = vpack.c.b16 %v434, %v430
    %v531 = vpack.c.b16 %v435, %v431
    %v532 = vpack.c.b16 %v440, %v436
    %v533 = vpack.c.b16 %v441, %v437
    %v534 = vpack.c.b16 %v442, %v438
    %v535 = vpack.c.b16 %v443, %v439
    %v536 = vpack.c.b16 %v448, %v444
    %v537 = vpack.c.b16 %v449, %v445
    %v538 = vpack.c.b16 %v450, %v446
    %v539 = vpack.c.b16 %v451, %v447
    %v540 = vpack.c.b16 %v456, %v452
    %v541 = vpack.c.b16 %v457, %v453
    %v542 = vpack.c.b16 %v458, %v454
    %v543 = vpack.c.b16 %v459, %v455
    %v544 = vpack.c.b16 %v464, %v460
    %v545 = vpack.c.b16 %v465, %v461
    %v546 = vpack.c.b16 %v466, %v462
    %v547 = vpack.c.b16 %v467, %v463
    %v548 = vpack.c.b16 %v472, %v468
    %v549 = vpack.c.b16 %v473, %v469
    %v550 = vpack.c.b16 %v474, %v470
    %v551 = vpack.c.b16 %v475, %v471
    %v552 = vpack.c.b16 %v480, %v476
    %v553 = vpack.c.b16 %v481, %v477
    %v554 = vpack.c.b16 %v482, %v478
    %v555 = vpack.c.b16 %v483, %v479
    %v556 = vpack.c.b16 %v488, %v484
    %v557 = vpack.c.b16 %v489, %v485
    %v558 = vpack.c.b16 %v490, %v486
    %v559 = vpack.c.b16 %v491, %v487
    %v560 = vpack.c.b16 %v496, %v492
    %v561 = vpack.c.b16 %v497, %v493
    %v562 = vpack.c.b16 %v498, %v494
    %v563 = vpack.c.b16 %v499, %v495
    %628 = vmatpush.bf16.msra.mxu0 %v528
    %629 = vmatpush.bf16.msra.mxu0 %v524
    %630 = vmatpush.bf16.msra.mxu0 %v520
    %631 = vmatpush.bf16.msra.mxu0 %v516
    %632 = vmatpush.bf16.msra.mxu0 %v512
    %633 = vmatpush.bf16.msra.mxu0 %v508
    %634 = vmatpush.bf16.msra.mxu0 %v504
    %635 = vmatpush.bf16.msra.mxu0 %v500
    %636 = vmatmul.bf16.gmra.mxu0 %v227
    %v637 = vpop.f32.mrf.mxu0
    %v638 = vadd.f32 %v304, %v637
    %v639 = vpop.f32.mrf.mxu0
    %640 = vdwg.mxu0
    %641 = vmatpush.bf16.msra.mxu0 %v560
    %642 = vmatpush.bf16.msra.mxu0 %v556
    %643 = vmatpush.bf16.msra.mxu0 %v552
    %644 = vmatpush.bf16.msra.mxu0 %v548
    %645 = vmatpush.bf16.msra.mxu0 %v544
    %646 = vmatpush.bf16.msra.mxu0 %v540
    %647 = vmatpush.bf16.msra.mxu0 %v536
    %648 = vmatpush.bf16.msra.mxu0 %v532
    %649 = vmatmul.bf16.gmra.mxu0 %v228
    %v650 = vpop.f32.mrf.mxu0
    %v651 = vadd.f32 %v638, %v650
    %v652 = vpop.f32.mrf.mxu0
    %653 = vdwg.mxu0
    %654 = vmatpush.bf16.msra.mxu0 %v529
    %655 = vmatpush.bf16.msra.mxu0 %v525
    %656 = vmatpush.bf16.msra.mxu0 %v521
    %657 = vmatpush.bf16.msra.mxu0 %v517
    %658 = vmatpush.bf16.msra.mxu0 %v513
    %659 = vmatpush.bf16.msra.mxu0 %v509
    %660 = vmatpush.bf16.msra.mxu0 %v505
    %661 = vmatpush.bf16.msra.mxu0 %v501
    %662 = vmatmul.bf16.gmra.mxu0 %v227
    %v663 = vpop.f32.mrf.mxu0
    %v664 = vadd.f32 %v305, %v663
    %v665 = vpop.f32.mrf.mxu0
    %666 = vdwg.mxu0
    %667 = vmatpush.bf16.msra.mxu0 %v561
    %668 = vmatpush.bf16.msra.mxu0 %v557
    %669 = vmatpush.bf16.msra.mxu0 %v553
    %670 = vmatpush.bf16.msra.mxu0 %v549
    %671 = vmatpush.bf16.msra.mxu0 %v545
    %672 = vmatpush.bf16.msra.mxu0 %v541
    %673 = vmatpush.bf16.msra.mxu0 %v537
    %674 = vmatpush.bf16.msra.mxu0 %v533
    %675 = vmatmul.bf16.gmra.mxu0 %v228
    %v676 = vpop.f32.mrf.mxu0
    %v677 = vadd.f32 %v664, %v676
    %v678 = vpop.f32.mrf.mxu0
    %679 = vdwg.mxu0
    %680 = vmatpush.bf16.msra.mxu0 %v530
    %681 = vmatpush.bf16.msra.mxu0 %v526
    %682 = vmatpush.bf16.msra.mxu0 %v522
    %683 = vmatpush.bf16.msra.mxu0 %v518
    %684 = vmatpush.bf16.msra.mxu0 %v514
    %685 = vmatpush.bf16.msra.mxu0 %v510
    %686 = vmatpush.bf16.msra.mxu0 %v506
    %687 = vmatpush.bf16.msra.mxu0 %v502
    %688 = vmatmul.bf16.gmra.mxu0 %v227
    %v689 = vpop.f32.mrf.mxu0
    %v690 = vadd.f32 %v306, %v689
    %v691 = vpop.f32.mrf.mxu0
    %692 = vdwg.mxu0
    %693 = vmatpush.bf16.msra.mxu0 %v562
    %694 = vmatpush.bf16.msra.mxu0 %v558
    %695 = vmatpush.bf16.msra.mxu0 %v554
    %696 = vmatpush.bf16.msra.mxu0 %v550
    %697 = vmatpush.bf16.msra.mxu0 %v546
    %698 = vmatpush.bf16.msra.mxu0 %v542
    %699 = vmatpush.bf16.msra.mxu0 %v538
    %700 = vmatpush.bf16.msra.mxu0 %v534
    %701 = vmatmul.bf16.gmra.mxu0 %v228
    %v702 = vpop.f32.mrf.mxu0
    %v703 = vadd.f32 %v690, %v702
    %v704 = vpop.f32.mrf.mxu0
    %705 = vdwg.mxu0
    %706 = vmatpush.bf16.msra.mxu0 %v531
    %707 = vmatpush.bf16.msra.mxu0 %v527
    %708 = vmatpush.bf16.msra.mxu0 %v523
    %709 = vmatpush.bf16.msra.mxu0 %v519
    %710 = vmatpush.bf16.msra.mxu0 %v515
    %711 = vmatpush.bf16.msra.mxu0 %v511
    %712 = vmatpush.bf16.msra.mxu0 %v507
    %713 = vmatpush.bf16.msra.mxu0 %v503
    %714 = vmatmul.bf16.gmra.mxu0 %v227
    %v715 = vpop.f32.mrf.mxu0
    %v716 = vadd.f32 %v307, %v715
    %v717 = vpop.f32.mrf.mxu0
    %718 = vdwg.mxu0
    %719 = vmatpush.bf16.msra.mxu0 %v563
    %720 = vmatpush.bf16.msra.mxu0 %v559
    %721 = vmatpush.bf16.msra.mxu0 %v555
    %722 = vmatpush.bf16.msra.mxu0 %v551
    %723 = vmatpush.bf16.msra.mxu0 %v547
    %724 = vmatpush.bf16.msra.mxu0 %v543
    %725 = vmatpush.bf16.msra.mxu0 %v539
    %726 = vmatpush.bf16.msra.mxu0 %v535
    %727 = vmatmul.bf16.gmra.mxu0 %v228
    %v728 = vpop.f32.mrf.mxu0
    %v729 = vadd.f32 %v716, %v728
    %v730 = vpop.f32.mrf.mxu0
    %731 = vdwg.mxu0
    %v732 = vmul.f32 %v651, %v651
    %733 = vadd.xlane.f32.xlu0 %v732
    %v734 = vpop.xlane.xlu0 %733
    %v735 = vmax.f32 %v734, 1e-24
    %v736 = vrsqrt.pop %v735
    %v737 = vmul.f32 %v736, %v735
    %v738 = vmul.f32 %v737, %v736
    %v739 = vmul.f32 0.5, %v738
    %v740 = vsub.f32 1.5, %v739
    %v741 = vmul.f32 %v736, %v740
    %vm742 = vweird.f32 %v735
    %vm743 = vweird.f32 %v736
    %vm744 = vmor %vm742, %vm743
    %v745 = vsel %vm744, %v736, %v741
    %v746 = vmul.f32 %v651, %v745
    %747 = vst [vmem:[#allocation11] sm:$0xff] %v746
    %v748 = vmul.f32 %v677, %v677
    %749 = vadd.xlane.f32.xlu0 %v748
    %v750 = vpop.xlane.xlu0 %749
    %v751 = vmax.f32 %v750, 1e-24
    %v752 = vrsqrt.pop %v751
    %v753 = vmul.f32 %v752, %v751
    %v754 = vmul.f32 %v753, %v752
    %v755 = vmul.f32 0.5, %v754
    %v756 = vsub.f32 1.5, %v755
    %v757 = vmul.f32 %v752, %v756
    %vm758 = vweird.f32 %v751
    %vm759 = vweird.f32 %v752
    %vm760 = vmor %vm758, %vm759
    %v761 = vsel %vm760, %v752, %v757
    %v762 = vmul.f32 %v677, %v761
    %s763 = scalar_lea.vmem [#allocation11], 8
    %764 = vst [vmem:[%s763] sm:$0xff] %v762
    %v765 = vmul.f32 %v703, %v703
    %766 = vadd.xlane.f32.xlu0 %v765
    %v767 = vpop.xlane.xlu0 %766
    %v768 = vmax.f32 %v767, 1e-24
    %v769 = vrsqrt.pop %v768
    %v770 = vmul.f32 %v769, %v768
    %v771 = vmul.f32 %v770, %v769
    %v772 = vmul.f32 0.5, %v771
    %v773 = vsub.f32 1.5, %v772
    %v774 = vmul.f32 %v769, %v773
    %vm775 = vweird.f32 %v768
    %vm776 = vweird.f32 %v769
    %vm777 = vmor %vm775, %vm776
    %v778 = vsel %vm777, %v769, %v774
    %v779 = vmul.f32 %v703, %v778
    %s780 = scalar_lea.vmem [#allocation11], 16
    %781 = vst [vmem:[%s780] sm:$0xff] %v779
    %v782 = vmul.f32 %v729, %v729
    %783 = vadd.xlane.f32.xlu0 %v782
    %v784 = vpop.xlane.xlu0 %783
    %v785 = vmax.f32 %v784, 1e-24
    %v786 = vrsqrt.pop %v785
    %v787 = vmul.f32 %v786, %v785
    %v788 = vmul.f32 %v787, %v786
    %v789 = vmul.f32 0.5, %v788
    %v790 = vsub.f32 1.5, %v789
    %v791 = vmul.f32 %v786, %v790
    %vm792 = vweird.f32 %v785
    %vm793 = vweird.f32 %v786
    %vm794 = vmor %vm792, %vm793
    %v795 = vsel %vm794, %v786, %v791
    %v796 = vmul.f32 %v729, %v795
    %s797 = scalar_lea.vmem [#allocation11], 24
    %798 = vst [vmem:[%s797] sm:$0xff] %v796
    // Predicated region
    $region42: #{tpu_custom_call.1} parent=1 // pred_check
      _
    $region43: #{tpu_custom_call.1} parent=1 // pred_check_branch
      %800 = sbr.rel (0) target = $region45
    $region44: #{tpu_custom_call.1} parent=1 // pred_region
      %802 = vsyncadd [#allocation4], 0
      %s803 = sshll.u32 [#allocation11], 4
      %s804 = int_to_ptr.vmem [resolvable:$true] %s803
      %s805 = sshll.u32 %s5, 4
      %s806 = int_to_ptr.hbm [resolvable:$true] %s805
      %811 = dma.vmem_to_hbm [thread:$0]  %s804, 512, %s806, [#allocation4], 128, 128, 8
    $region45: #{tpu_custom_call.1} parent=1 // pred_fallthru
      _
    // Predicated region
    $region46: #{tpu_custom_call.1} parent=1 // pred_check
      _
    $region47: #{tpu_custom_call.1} parent=1 // pred_check_branch
      %813 = sbr.rel (0) target = $region49
    $region48: #{tpu_custom_call.1} parent=1 // pred_region
      %815 = dma.done [#allocation4], 512
    $region49: #{tpu_custom_call.1} parent=1 // pred_fallthru
      _
    %816 = vsyncpa [#allocation3], 1
    %817 = vsyncpa [#allocation6], 1
    %818 = vsyncpa [#allocation9], 1
    %819 = vsyncpa [#allocation4], 1

</llo_original>
